<compile_context>
chip_gen: v5e
topology: v5e:2x2
jax: 0.10.0
libtpu: 0.0.40
codegen_flags: <defaults>
</compile_context>

<pallas_src>
import jax
import jax.numpy as jnp
import numpy as np
from jax.experimental import pallas as pl
from jax.experimental.pallas import tpu as pltpu  # noqa: F401  (TPU backend)

WIDTH = 50
N_SAMPLES = 10

# TPU-friendly padded sizes
M_PAD = 16    # rows: multiple of 8 sublanes
H_PAD = 128   # hidden width padded to the 128-lane width
P_ROWS = 8    # packed-parameter slab rows (one sublane tile)


def mlp_kernel(x_ref, p_ref, o_ref):
    p = p_ref[...]           # (8, H_PAD) packed params: row0=w1, row1=b1, row2=w2
    w1 = p[0:1, :]           # (1, H_PAD)
    b1 = p[1:2, :]           # (1, H_PAD)
    w2 = p[2:3, :]           # (1, H_PAD)

    # Layer 1 (Linear in_features=1 + ReLU): contraction dim is 1 -> pure VPU
    # broadcast multiply-add.  (M_PAD, 1) * (1, H_PAD) -> (M_PAD, H_PAD).
    h = jnp.maximum(x_ref[...] * w1 + b1, 0.0)

    # Layer 2 (Linear out_features=1, no bias): VPU multiply + XLU lane reduce.
    y = jnp.sum(h * w2, axis=-1, keepdims=True)      # (M_PAD, 1)

    # Broadcast the reduced column across lanes so the store is lane-dense
    # (unmasked vst); the wrapper slices column 0.
    o_ref[...] = jnp.broadcast_to(y, o_ref.shape)


def prepare_params(w1, b1, w2):
    """Pack parameters into one (8, 128) slab ONCE, outside the per-call path.

    Row 0: w1 (shape (1, WIDTH) padded to 128 lanes)
    Row 1: b1
    Row 2: w2 (column (WIDTH, 1) transposed to a row)
    Rows 3..7: zeros (padding to the 8-sublane tile).
    """
    p = jnp.zeros((P_ROWS, H_PAD), jnp.float32)
    p = p.at[0, :WIDTH].set(w1[0, :])
    p = p.at[1, :WIDTH].set(b1)
    p = p.at[2, :WIDTH].set(w2[:, 0])
    return p


def _mlp_pallas(x_col, params):
    return pl.pallas_call(
        mlp_kernel,
        out_shape=jax.ShapeDtypeStruct((M_PAD, H_PAD), jnp.float32),
        in_specs=[
            pl.BlockSpec((M_PAD, 1), lambda: (0, 0)),      # x column
            pl.BlockSpec((P_ROWS, H_PAD), lambda: (0, 0)),  # packed params
        ],
        out_specs=pl.BlockSpec((M_PAD, H_PAD), lambda: (0, 0)),
        # Tiny, overhead-bound op: advise XLA's scheduler so it does not plan
        # around it pessimistically.
        cost_estimate=pl.CostEstimate(
            flops=4 * M_PAD * H_PAD,
            transcendentals=0,
            bytes_accessed=(M_PAD * 1 + P_ROWS * H_PAD + M_PAD * H_PAD) * 4,
        ),
    )(x_col, params)


@jax.jit
def net_forward(x, params):
    """x: (N, 1) f32; params: pre-packed (8, 128) slab. Returns (N, 1)."""
    n = x.shape[0]
    # Only x needs per-call padding: pad rows to M_PAD, keep the single lane.
    x_col = jnp.zeros((M_PAD, 1), jnp.float32).at[:n, :].set(x)
    out_pad = _mlp_pallas(x_col, params)
    return out_pad[:n, :1]


if __name__ == "__main__":
    # Deterministic parameter init (PyTorch-style uniform(-1/sqrt(fan_in), ...)).
    key = jax.random.PRNGKey(0)
    k1, k2, k3 = jax.random.split(key, 3)

    bound1 = 1.0 / np.sqrt(1.0)      # fan_in = 1 for first Linear
    bound2 = 1.0 / np.sqrt(WIDTH)    # fan_in = width for second Linear

    # nn.Linear stores weight as (out, in); we keep the math-friendly (in, out).
    w1 = jax.random.uniform(k1, (1, WIDTH), jnp.float32, -bound1, bound1)
    b1 = jax.random.uniform(k2, (WIDTH,), jnp.float32, -bound1, bound1)
    w2 = jax.random.uniform(k3, (WIDTH, 1), jnp.float32, -bound2, bound2)

    # One-time parameter packing (hoisted out of the forward call path).
    params = jax.block_until_ready(prepare_params(w1, b1, w2))

    # Input matching the reference script: x = linspace(-1, 1, n_samples).reshape(-1, 1)
    x = jnp.linspace(-1.0, 1.0, N_SAMPLES, dtype=jnp.float32).reshape(-1, 1)

    y = net_forward(x, params)
    y = jax.block_until_ready(y)

    # Pure-JAX reference check
    y_ref = jnp.maximum(x @ w1 + b1[None, :], 0.0) @ w2
    np.testing.assert_allclose(np.asarray(y), np.asarray(y_ref), rtol=1e-5, atol=1e-5)

    print("KERNEL_OK")
</pallas_src>

<mosaic_0001>
module attributes {stable_mosaic.version = 11 : i64} {
  func.func @mlp_kernel(%arg0: memref<16x1xf32, #tpu.memory_space<vmem>>, %arg1: memref<8x128xf32, #tpu.memory_space<vmem>>, %arg2: memref<16x128xf32, #tpu.memory_space<vmem>>) attributes {dimension_semantics = [], scalar_prefetch = 0 : i64, scratch_operands = 0 : i64, tpu.core_type = #tpu.core_type<tc>} {
    %c0 = arith.constant 0 : index
    %c0_0 = arith.constant 0 : index
    %0 = vector.load %arg1[%c0, %c0_0] : memref<8x128xf32, #tpu.memory_space<vmem>>, vector<8x128xf32>
    %1 = vector.extract_strided_slice %0 {offsets = [0, 0], sizes = [1, 128], strides = [1, 1]} : vector<8x128xf32> to vector<1x128xf32>
    %2 = vector.extract_strided_slice %0 {offsets = [1, 0], sizes = [1, 128], strides = [1, 1]} : vector<8x128xf32> to vector<1x128xf32>
    %3 = vector.extract_strided_slice %0 {offsets = [2, 0], sizes = [1, 128], strides = [1, 1]} : vector<8x128xf32> to vector<1x128xf32>
    %c0_1 = arith.constant 0 : index
    %c0_2 = arith.constant 0 : index
    %4 = vector.load %arg0[%c0_1, %c0_2] : memref<16x1xf32, #tpu.memory_space<vmem>>, vector<16x1xf32>
    %5 = vector.broadcast %4 : vector<16x1xf32> to vector<16x128xf32>
    %6 = vector.broadcast %1 : vector<1x128xf32> to vector<16x128xf32>
    %7 = arith.mulf %5, %6 : vector<16x128xf32>
    %8 = vector.broadcast %2 : vector<1x128xf32> to vector<16x128xf32>
    %9 = arith.addf %7, %8 : vector<16x128xf32>
    %cst = arith.constant 0.000000e+00 : f32
    %10 = vector.broadcast %cst : f32 to vector<16x128xf32>
    %11 = arith.maximumf %9, %10 : vector<16x128xf32>
    %12 = vector.broadcast %3 : vector<1x128xf32> to vector<16x128xf32>
    %13 = arith.mulf %11, %12 : vector<16x128xf32>
    %cst_3 = arith.constant dense<0.000000e+00> : vector<16xf32>
    %14 = vector.multi_reduction <add>, %13, %cst_3 [1] : vector<16x128xf32> to vector<16xf32>
    %15 = vector.shape_cast %14 : vector<16xf32> to vector<16x1xf32>
    %16 = vector.shape_cast %15 : vector<16x1xf32> to vector<16x1xf32>
    %17 = vector.broadcast %16 : vector<16x1xf32> to vector<16x128xf32>
    %c0_4 = arith.constant 0 : index
    %c0_5 = arith.constant 0 : index
    %18 = vector.load %arg2[%c0_4, %c0_5] : memref<16x128xf32, #tpu.memory_space<vmem>>, vector<16x128xf32>
    tpu.vector_store %arg2[%c0_4, %c0_5], %17 {strides = array<i32>} : memref<16x128xf32, #tpu.memory_space<vmem>>, vector<16x128xf32>,
    return
  }
}

</mosaic_0001>

<llo_original>
// kernel: net_forward.1
$region0: #{net_forward.1}
  #allocation0 [shape = 'u32[]', space=smem, size = 0x4, offset = 0x4, fixed_abs, tag = 'smem constant byte address 0x4 - core index']
  #allocation1 [shape = 'u32[72,128]{1,0:T(1,128)}', space=vmem, size = 0x9000, scoped, tag = 'internal scratch']
  %s0 = inlined_call_operand.vmem [shape: f32[16,1], index: 0, kind: input, shape index: {}]
  %s1 = inlined_call_operand.vmem [shape: f32[8,128], index: 1, kind: input, shape index: {}]
  %s2 = inlined_call_operand.vmem [shape: f32[16,128], index: 2, kind: output, shape index: {}]
  %s3 = sld [smem:[#allocation0]]
  $region18: #{net_forward.1} parent=0
    _
  %s5 = ssub.s32 1, %s3
  %s6 = scalar_select 0, %s5, %s3
  // Predicated region
  $region2: #{net_forward.1} parent=0 // pred_check
    _
  $region3: #{net_forward.1} parent=0 // pred_check_branch
    %8 = sbr.rel (0) target = $region5
  $region4: #{net_forward.1} parent=0 // pred_region
    _
  $region5: #{net_forward.1} parent=0 // pred_fallthru
    _
  // Predicated region
  $region6: #{net_forward.1} parent=0 // pred_check
    _
  $region7: #{net_forward.1} parent=0 // pred_check_branch
    %10 = sbr.rel (0) target = $region9
  $region8: #{net_forward.1} parent=0 // pred_region
    _
  $region9: #{net_forward.1} parent=0 // pred_fallthru
    _
  %v11 = vld [vmem:[%s1] sm:$0xff]
  %v12 = vld [vmem:[%s0] sm:$0xff]
  %v13 = vld [vmem:[%s0 + $0x8] sm:$0xff]
  %15 = vset.pattern.permute.xlu0 0
  %16 = vperm.xlu0 %15, %v12
  %v17 = vpop.permute.xlu0 %16
  %20 = vset.pattern.permute.xlu0 0
  %21 = vperm.xlu0 %20, %v13
  %v22 = vpop.permute.xlu0 %21
  %v24 = vperm.slane %v11, 0
  %v25 = vmul.f32 %v17, %v24
  %v26 = vmul.f32 %v22, %v24
  %v27 = vperm.slane %v11, 1
  %v28 = vadd.f32 %v25, %v27
  %v29 = vadd.f32 %v26, %v27
  %v30 = vmax.f32 %v28, 0.0
  %v31 = vmax.f32 %v29, 0.0
  %v32 = vperm.slane %v11, 2
  %v33 = vmul.f32 %v30, %v32
  %v34 = vmul.f32 %v31, %v32
  %35 = vadd.xlane.f32.xlu0 %v33
  %v36 = vpop.xlane.xlu0 %35
  %37 = vadd.xlane.f32.xlu0 %v34
  %v38 = vpop.xlane.xlu0 %37
  %39 = vst [vmem:[%s2] sm:$0xff] %v36
  %40 = vst [vmem:[%s2 + $0x8] sm:$0xff] %v38
  // Predicated region
  $region10: #{net_forward.1} parent=0 // pred_check
    _
  $region11: #{net_forward.1} parent=0 // pred_check_branch
    %42 = sbr.rel (0) target = $region13
  $region12: #{net_forward.1} parent=0 // pred_region
    _
  $region13: #{net_forward.1} parent=0 // pred_fallthru
    _
  // Predicated region
  $region14: #{net_forward.1} parent=0 // pred_check
    _
  $region15: #{net_forward.1} parent=0 // pred_check_branch
    %44 = sbr.rel (0) target = $region17
  $region16: #{net_forward.1} parent=0 // pred_region
    _
  $region17: #{net_forward.1} parent=0 // pred_fallthru
    _

</llo_original>
